<compile_context>
chip_gen: v5e
topology: v5e:2x2
jax: 0.10.0
libtpu: 0.0.40
codegen_flags: <defaults>
</compile_context>

<pallas_src>
import math
import functools

import jax
import jax.numpy as jnp
from jax.experimental import pallas as pl
from jax.experimental.pallas import tpu as pltpu


# ---------------------------------------------------------------------------
# Kernels
# ---------------------------------------------------------------------------
def _pe_add_kernel(x_ref, pe_ref, o_ref):
    # x_ref: (TS, B, D) tile; pe_ref: (TS, 1, D) tile.
    # The broadcast over the batch axis happens on the VPU; HBM only carries pe
    # once per sequence row.
    o_ref[...] = x_ref[...] + pe_ref[...]


def _pe_add_dropout_kernel(x_ref, pe_ref, keep_ref, o_ref, *, scale):
    # Training-mode inverted dropout fused with the PE add.  keep_ref holds a
    # precomputed Bernoulli keep-mask (int8, same shape as x).
    # TODO(synk): use the in-kernel TPU hardware PRNG (pltpu.prng_seed /
    # prng_random_bits) once the execution environment supports it; it would
    # remove the 1 byte/elem mask read from HBM.
    y = x_ref[...] + pe_ref[...]
    keep = keep_ref[...] != 0
    o_ref[...] = jnp.where(keep, y * jnp.asarray(scale, y.dtype), jnp.zeros_like(y))


# ---------------------------------------------------------------------------
# Parameter setup (deterministic, matches the torch __init__ buffer exactly)
# ---------------------------------------------------------------------------
def make_pe_table(max_len, d_model, dtype=jnp.float32):
    position = jnp.arange(max_len, dtype=jnp.float32)[:, None]            # (max_len, 1)
    div_term = jnp.exp(
        jnp.arange(0, d_model, 2, dtype=jnp.float32) * (-math.log(10000.0) / d_model)
    )                                                                      # (d_model/2,)
    pe = jnp.zeros((max_len, d_model), dtype=jnp.float32)
    pe = pe.at[:, 0::2].set(jnp.sin(position * div_term))
    pe = pe.at[:, 1::2].set(jnp.cos(position * div_term))
    # unsqueeze(0).transpose(0, 1) -> (max_len, 1, d_model)
    return pe[:, None, :].astype(dtype)


# ---------------------------------------------------------------------------
# Wrapper
# ---------------------------------------------------------------------------
def _choose_tile_s(S, B, D, itemsize, vmem_budget_bytes=8 * 1024 * 1024):
    # Per grid step (double-buffered).  Account for sublane (8) / lane (128)
    # padding of the last two dims inside VMEM.
    pad_b = -(-B // 8) * 8
    pad_d = -(-D // 128) * 128
    # x tile + out tile + pe tile (+ int8 mask tile, worst case), double-buffered.
    bytes_per_row = 2 * ((2 * pad_b + 8) * pad_d * itemsize + pad_b * pad_d)
    ts = max(1, vmem_budget_bytes // bytes_per_row)
    return int(min(ts, S))


def positional_encoding(x, pe, *, dropout_rate=0.1, training=False, rng_key=None,
                        tile_s=None):
    """x: (S, B, D); pe: (max_len, 1, D) buffer. Returns (S, B, D)."""
    S, B, D = x.shape
    max_len = pe.shape[0]
    assert S <= max_len, f"sequence length {S} exceeds max_len {max_len}"
    assert pe.shape == (max_len, 1, D), "pe buffer shape mismatch"

    rate = float(dropout_rate)
    use_dropout = training and rate > 0.0
    if use_dropout and rate >= 1.0:
        # torch F.dropout(p=1.0) zeroes everything.
        return jnp.zeros_like(x)

    ts = tile_s if tile_s is not None else _choose_tile_s(S, B, D, x.dtype.itemsize)
    ts = int(min(max(ts, 1), S))
    grid = (pl.cdiv(S, ts),)

    compiler_params = pltpu.CompilerParams(
        dimension_semantics=("parallel",),          # megacore sharding on v7x
        vmem_limit_bytes=32 * 1024 * 1024,          # explicit; safe on v5e/v6e/v7x
    )
    out_shape = jax.ShapeDtypeStruct(x.shape, x.dtype)

    x_spec = pl.BlockSpec((ts, B, D), lambda s: (s, 0, 0))
    pe_spec = pl.BlockSpec((ts, 1, D), lambda s: (s, 0, 0))   # windows full pe buffer
    out_spec = pl.BlockSpec((ts, B, D), lambda s: (s, 0, 0))

    if not use_dropout:
        # Eval-mode dropout is the identity; only the tiled PE add runs in-kernel.
        return pl.pallas_call(
            _pe_add_kernel,
            out_shape=out_shape,
            grid=grid,
            in_specs=[x_spec, pe_spec],
            out_specs=out_spec,
            compiler_params=compiler_params,
        )(x, pe)

    # Training mode: PE add + inverted dropout, fused in one tiled kernel.
    if rng_key is None:
        rng_key = jax.random.PRNGKey(0)
    scale = 1.0 / (1.0 - rate)
    keep = jax.random.bernoulli(rng_key, 1.0 - rate, shape=x.shape).astype(jnp.int8)
    kernel = functools.partial(_pe_add_dropout_kernel, scale=scale)
    return pl.pallas_call(
        kernel,
        out_shape=out_shape,
        grid=grid,
        in_specs=[x_spec, pe_spec, pl.BlockSpec((ts, B, D), lambda s: (s, 0, 0))],
        out_specs=out_spec,
        compiler_params=compiler_params,
    )(x, pe, keep)


# ---------------------------------------------------------------------------
# Main
# ---------------------------------------------------------------------------
if __name__ == "__main__":
    S, B, D = 64, 2, 256        # seq_len, batch, d_model (vietocr uses d_model=256)
    MAX_LEN = 100               # torch default max_len
    DROPOUT = 0.1

    key = jax.random.PRNGKey(0)
    key_x, key_drop = jax.random.split(key)
    x = jax.random.normal(key_x, (S, B, D), dtype=jnp.float32)
    pe = make_pe_table(MAX_LEN, D, dtype=jnp.float32)

    ref = x + pe[:S]

    # Eval mode (dropout = identity). tile_s=16 forces a multi-step grid so the
    # tiled/pipelined path is exercised even at this small demo size.
    out = positional_encoding(x, pe, dropout_rate=DROPOUT, training=False, tile_s=16)
    out = jax.block_until_ready(out)
    assert out.shape == (S, B, D) and out.dtype == x.dtype
    assert jnp.allclose(out, ref, atol=1e-6, rtol=1e-6)

    # Auto-tiled eval path (tile chosen from the VMEM budget).
    out2 = jax.block_until_ready(positional_encoding(x, pe, training=False))
    assert jnp.allclose(out2, ref, atol=1e-6, rtol=1e-6)

    # Training mode: fused PE-add + inverted dropout (mask generated host-side
    # with the same key, so the expected output is exactly reproducible).
    out_tr = positional_encoding(
        x, pe, dropout_rate=DROPOUT, training=True, rng_key=key_drop, tile_s=16
    )
    out_tr = jax.block_until_ready(out_tr)
    scale = 1.0 / (1.0 - DROPOUT)
    keep_ref = jax.random.bernoulli(key_drop, 1.0 - DROPOUT, shape=x.shape)
    expected_tr = jnp.where(keep_ref, ref * scale, 0.0)
    assert jnp.allclose(out_tr, expected_tr, atol=1e-5, rtol=1e-5)
    frac_kept = float(jnp.mean(keep_ref.astype(jnp.float32)))
    assert 0.0 < frac_kept < 1.0                       # some kept, some dropped

    print("KERNEL_OK")
</pallas_src>

<mosaic_0001>
module attributes {stable_mosaic.version = 11 : i64} {
  func.func @_pe_add_kernel(%arg0: i32, %arg1: memref<16x2x256xf32, #tpu.memory_space<vmem>>, %arg2: memref<16x1x256xf32, #tpu.memory_space<vmem>>, %arg3: memref<16x2x256xf32, #tpu.memory_space<vmem>>) attributes {dimension_semantics = [#tpu.dimension_semantics<parallel>], iteration_bounds = array<i64: 4>, scalar_prefetch = 0 : i64, scratch_operands = 0 : i64, tpu.core_type = #tpu.core_type<tc>, window_params = [{transform_indices = @transform_0, window_bounds = array<i64: 16, 2, 256>}, {transform_indices = @transform_1, window_bounds = array<i64: 16, 1, 256>}, {transform_indices = @transform_2, window_bounds = array<i64: 16, 2, 256>}]} {
    %c0 = arith.constant 0 : index
    %c0_0 = arith.constant 0 : index
    %c0_1 = arith.constant 0 : index
    %0 = vector.load %arg1[%c0, %c0_0, %c0_1] : memref<16x2x256xf32, #tpu.memory_space<vmem>>, vector<16x2x256xf32>
    %c0_2 = arith.constant 0 : index
    %c0_3 = arith.constant 0 : index
    %c0_4 = arith.constant 0 : index
    %1 = vector.load %arg2[%c0_2, %c0_3, %c0_4] : memref<16x1x256xf32, #tpu.memory_space<vmem>>, vector<16x1x256xf32>
    %2 = vector.broadcast %1 : vector<16x1x256xf32> to vector<16x2x256xf32>
    %3 = arith.addf %0, %2 : vector<16x2x256xf32>
    %c0_5 = arith.constant 0 : index
    %c0_6 = arith.constant 0 : index
    %c0_7 = arith.constant 0 : index
    %4 = vector.load %arg3[%c0_5, %c0_6, %c0_7] : memref<16x2x256xf32, #tpu.memory_space<vmem>>, vector<16x2x256xf32>
    tpu.vector_store %arg3[%c0_5, %c0_6, %c0_7], %3 {strides = array<i32>} : memref<16x2x256xf32, #tpu.memory_space<vmem>>, vector<16x2x256xf32>,
    return
  }
  func.func @transform_0(%arg0: i32) -> (i32, i32, i32) {
    %c0_i32 = arith.constant 0 : i32
    %c0_i32_0 = arith.constant 0 : i32
    %c0_i32_1 = arith.constant 0 : i32
    return %arg0, %c0_i32, %c0_i32_0 : i32, i32, i32
  }
  func.func @transform_1(%arg0: i32) -> (i32, i32, i32) {
    %c0_i32 = arith.constant 0 : i32
    %c0_i32_0 = arith.constant 0 : i32
    %c0_i32_1 = arith.constant 0 : i32
    return %arg0, %c0_i32, %c0_i32_0 : i32, i32, i32
  }
  func.func @transform_2(%arg0: i32) -> (i32, i32, i32) {
    %c0_i32 = arith.constant 0 : i32
    %c0_i32_0 = arith.constant 0 : i32
    %c0_i32_1 = arith.constant 0 : i32
    return %arg0, %c0_i32, %c0_i32_0 : i32, i32, i32
  }
}

</mosaic_0001>

<llo_original>
// kernel: tpu_custom_call.1
$region0: #{tpu_custom_call.1}
  #allocation0 [shape = 'u32[]', space=smem, size = 0x4, offset = 0x4, fixed_abs, tag = 'smem constant byte address 0x4 - core index']
  #allocation1 [shape = 'u32[72,128]{1,0:T(1,128)}', space=vmem, size = 0x9000, scoped, tag = 'internal scratch']
  %s0 = inlined_call_operand.hbm [shape: f32[64,2,256], index: 0, kind: input, shape index: {}]
  %s1 = inlined_call_operand.hbm [shape: f32[100,1,256], index: 1, kind: input, shape index: {}]
  %s2 = inlined_call_operand.hbm [shape: f32[64,2,256], index: 2, kind: output, shape index: {}]
  %s3 = sld [smem:[#allocation0]]
  $region49: #{tpu_custom_call.1} parent=0
    _
  %s5 = ssub.s32 1, %s3
  %s6 = scalar_select 0, %s5, %s3
  $region1: #{tpu_custom_call.1} parent=0
    #allocation2 [shape = 'u8[65536]{0}', space=vmem, size = 0x10000, scoped, tag = 'input window, operand 0']
    #allocation3 [shape = 's32[2]{0}', space=sflag, size = 0x8, scoped, tag = 'scoped memory for tpu_custom_call.1']
    #allocation4 [shape = 's32[2]{0}', space=sflag, size = 0x8, scoped, tag = 'scoped memory for tpu_custom_call.1']
    #allocation5 [shape = 'u8[32768]{0}', space=vmem, size = 0x8000, scoped, tag = 'input window, operand 1']
    #allocation6 [shape = 's32[2]{0}', space=sflag, size = 0x8, scoped, tag = 'scoped memory for tpu_custom_call.1']
    #allocation7 [shape = 'u8[65536]{0}', space=vmem, size = 0x10000, scoped, tag = 'output window, operand 0']
    %7 = vsyncpa [#allocation3], 0
    %s8 = scalar_lea.sflag [#allocation3], 1
    %9 = vsyncpa %s8, 0
    %10 = vsyncpa [#allocation6], 0
    %s11 = scalar_lea.sflag [#allocation6], 1
    %12 = vsyncpa %s11, 0
    %13 = vsyncpa [#allocation4], 0
    %s14 = scalar_lea.sflag [#allocation4], 1
    %15 = vsyncpa %s14, 0
    loop: start=0, step=1, limit=6
    $region2: #{tpu_custom_call.1} parent=1 // loop_pre_header
      _
    $region3: #{tpu_custom_call.1} parent=1 // loop_header
      %s17 = sphi 0, %s21
      %p18 = scmp.ge.s32.totalorder %s17, 6
      %s27 = sphi 0, %s29
      %s30 = sphi 0, %s27
      %s31 = sphi 0, %s30
      %s47 = sphi 0, %s31
      %s53 = sphi 0, %s55
      %s56 = sphi 0, %s53
      %s57 = sphi 0, %s56
      %s73 = sphi 0, %s57
      %s79 = sphi 0, %s81
      %s82 = sphi 0, %s79
      %s83 = sphi 0, %s82
      %s99 = sphi 0, %s83
    $region4: #{tpu_custom_call.1} parent=1 // loop_header_branch
      %20 = sbr.rel (%p18) target = $region8
    $region5: #{tpu_custom_call.1} parent=1 // loop_body
      %s22 = ssub.s32 %s17, 1
      %s23 = ssub.s32 %s17, 2
      %s24 = sadd.s32 %s17, 1
      %s25 = ssub.s32 %s17, %s24
      %p26 = scmp.eq.s32.totalorder %s25, 0
      %s28 = sadd.s32 %s27, 1
      %s29 = scalar_select %p26, %s27, %s28
      %p32 = pneg %p26
      %p33 = scmp.eq.s32.totalorder %s17, 3
      %p34 = por %p32, %p33
      %p35 = scmp.ne.s32.totalorder %s27, %s30
      %p36 = scmp.eq.s32.totalorder %s17, 0
      %p37 = por %p35, %p36
      %p38 = scmp.ne.s32.totalorder %s27, %s30
      %p39 = scmp.eq.s32.totalorder %s22, 3
      %p40 = por %p38, %p39
      %p41 = scmp.ne.s32.totalorder %s30, %s31
      %p42 = scmp.eq.s32.totalorder %s22, 0
      %p43 = por %p41, %p42
      %p44 = scmp.ne.s32.totalorder %s30, %s31
      %p45 = scmp.eq.s32.totalorder %s23, 3
      %p46 = por %p44, %p45
      %p48 = scmp.ne.s32.totalorder %s31, %s47
      %p49 = scmp.eq.s32.totalorder %s23, 0
      %p50 = por %p48, %p49
      %s51 = ssub.s32 %s17, %s24
      %p52 = scmp.eq.s32.totalorder %s51, 0
      %s54 = sadd.s32 %s53, 1
      %s55 = scalar_select %p52, %s53, %s54
      %p58 = pneg %p52
      %p59 = scmp.eq.s32.totalorder %s17, 3
      %p60 = por %p58, %p59
      %p61 = scmp.ne.s32.totalorder %s53, %s56
      %p62 = scmp.eq.s32.totalorder %s17, 0
      %p63 = por %p61, %p62
      %p64 = scmp.ne.s32.totalorder %s53, %s56
      %p65 = scmp.eq.s32.totalorder %s22, 3
      %p66 = por %p64, %p65
      %p67 = scmp.ne.s32.totalorder %s56, %s57
      %p68 = scmp.eq.s32.totalorder %s22, 0
      %p69 = por %p67, %p68
      %p70 = scmp.ne.s32.totalorder %s56, %s57
      %p71 = scmp.eq.s32.totalorder %s23, 3
      %p72 = por %p70, %p71
      %p74 = scmp.ne.s32.totalorder %s57, %s73
      %p75 = scmp.eq.s32.totalorder %s23, 0
      %p76 = por %p74, %p75
      %s77 = ssub.s32 %s17, %s24
      %p78 = scmp.eq.s32.totalorder %s77, 0
      %s80 = sadd.s32 %s79, 1
      %s81 = scalar_select %p78, %s79, %s80
      %p84 = pneg %p78
      %p85 = scmp.eq.s32.totalorder %s17, 3
      %p86 = por %p84, %p85
      %p87 = scmp.ne.s32.totalorder %s79, %s82
      %p88 = scmp.eq.s32.totalorder %s17, 0
      %p89 = por %p87, %p88
      %p90 = scmp.ne.s32.totalorder %s79, %s82
      %p91 = scmp.eq.s32.totalorder %s22, 3
      %p92 = por %p90, %p91
      %p93 = scmp.ne.s32.totalorder %s82, %s83
      %p94 = scmp.eq.s32.totalorder %s22, 0
      %p95 = por %p93, %p94
      %p96 = scmp.ne.s32.totalorder %s82, %s83
      %p97 = scmp.eq.s32.totalorder %s23, 3
      %p98 = por %p96, %p97
      %p100 = scmp.ne.s32.totalorder %s83, %s99
      %p101 = scmp.eq.s32.totalorder %s23, 0
      %p102 = por %p100, %p101
      %p103 = scmp.le.s32.totalorder 1, %s17
      %p104 = scmp.lt.s32.totalorder %s17, 5
      %p105 = pnand %p103, %p104
      %p106 = pneg %p105
      // Predicated region
      $region9: #{tpu_custom_call.1} parent=5 // pred_check
        _
      $region10: #{tpu_custom_call.1} parent=5 // pred_check_branch
        %108 = sbr.rel (%p105) target = $region12
      $region11: #{tpu_custom_call.1} parent=5 // pred_region
        %s109 = ssub.s32 %s17, 1
      $region12: #{tpu_custom_call.1} parent=5 // pred_fallthru
        _
      %p110 = scmp.lt.s32.totalorder %s17, 4
      // Predicated region
      $region13: #{tpu_custom_call.1} parent=5 // pred_check
        %p111 = pneg %p110
      $region14: #{tpu_custom_call.1} parent=5 // pred_check_branch
        %113 = sbr.rel (%p111) target = $region16
      $region15: #{tpu_custom_call.1} parent=5 // pred_region
        // Predicated region
        $region17: #{tpu_custom_call.1} parent=15 // pred_check
          %p114 = pneg %p37
        $region18: #{tpu_custom_call.1} parent=15 // pred_check_branch
          %116 = sbr.rel (%p114) target = $region20
        $region19: #{tpu_custom_call.1} parent=15 // pred_region
          %s117 = sand.u32 %s27, 1
          %s118 = scalar_lea.sflag [#allocation3], %s117
          %s119 = sand.u32 %s27, 1
          %s120 = smul.addr %s119, 64
          %s121 = scalar_lea.vmem [#allocation2], %s120
          %s122 = smul.u32 16, %s17
          %124 = vsyncadd %s118, 0
          %s125 = smul.addr %s122, 2
          %s126 = smul.addr %s125, 2
          %s127 = scalar_lea.hbm %s0, %s126
          %s128 = sshll.u32 %s127, 4
          %s129 = int_to_ptr.hbm [resolvable:$true] %s128
          %s130 = sshll.u32 %s121, 4
          %s131 = int_to_ptr.vmem [resolvable:$true] %s130
          %136 = dma.hbm_to_vmem [thread:$0]  %s129, 1024, %s131, %s118, 64, 64, 4
        $region20: #{tpu_custom_call.1} parent=15 // pred_fallthru
          _
        // Predicated region
        $region21: #{tpu_custom_call.1} parent=15 // pred_check
          %p137 = pneg %p63
        $region22: #{tpu_custom_call.1} parent=15 // pred_check_branch
          %139 = sbr.rel (%p137) target = $region24
        $region23: #{tpu_custom_call.1} parent=15 // pred_region
          %s140 = sand.u32 %s53, 1
          %s141 = scalar_lea.sflag [#allocation6], %s140
          %s142 = sand.u32 %s53, 1
          %s143 = smul.addr %s142, 32
          %s144 = scalar_lea.vmem [#allocation5], %s143
          %s145 = smul.u32 16, %s17
          %s146 = ssub.s32 100, %s145
          %p147 = scmp.lt.s32.totalorder %s146, 16
          %s148 = scalar_select %p147, %s146, 16
          %s149 = smul.u32 %s148, 2
          %s150 = ssub.s32 32, %s149
          %s151 = sshll.u32 %s150, 4
          %152 = vsyncadd %s141, %s151
          %p153 = scmp.ne.s32.totalorder 0, %s149
          %s154 = smul.addr %s145, 2
          %s155 = scalar_lea.hbm %s1, %s154
          %s156 = smul.u32 2, %s148
          %s157 = sshll.u32 %s155, 4
          %s158 = int_to_ptr.hbm [resolvable:$true] %s157
          %s159 = sshll.u32 %s144, 4
          %s160 = int_to_ptr.vmem [resolvable:$true] %s159
          %s161 = sshll.u32 %s156, 4
          %165 = dma.hbm_to_vmem [thread:$0]  (%p153), %s158, %s161, %s160, %s141, 32, 32, 2
        $region24: #{tpu_custom_call.1} parent=15 // pred_fallthru
          _
      $region16: #{tpu_custom_call.1} parent=5 // pred_fallthru
        _
      %p166 = scmp.le.s32.totalorder 1, %s17
      %p167 = scmp.lt.s32.totalorder %s17, 5
      %p168 = pnand %p166, %p167
      %p169 = pneg %p168
      // Predicated region
      $region25: #{tpu_custom_call.1} parent=5 // pred_check
        _
      $region26: #{tpu_custom_call.1} parent=5 // pred_check_branch
        %171 = sbr.rel (%p168) target = $region28
      $region27: #{tpu_custom_call.1} parent=5 // pred_region
        %s172 = ssub.s32 %s17, 1
        %s173 = sand.u32 %s30, 1
        %s174 = scalar_lea.sflag [#allocation3], %s173
        %s175 = sand.u32 %s30, 1
        %s176 = smul.addr %s175, 64
        %s177 = scalar_lea.vmem [#allocation2], %s176
        // Predicated region
        $region29: #{tpu_custom_call.1} parent=27 // pred_check
          %p178 = pneg %p43
        $region30: #{tpu_custom_call.1} parent=27 // pred_check_branch
          %180 = sbr.rel (%p178) target = $region32
        $region31: #{tpu_custom_call.1} parent=27 // pred_region
          %182 = dma.done %s174, 1024
        $region32: #{tpu_custom_call.1} parent=27 // pred_fallthru
          _
        %s183 = sand.u32 %s56, 1
        %s184 = scalar_lea.sflag [#allocation6], %s183
        %s185 = sand.u32 %s56, 1
        %s186 = smul.addr %s185, 32
        %s187 = scalar_lea.vmem [#allocation5], %s186
        // Predicated region
        $region33: #{tpu_custom_call.1} parent=27 // pred_check
          %p188 = pneg %p69
        $region34: #{tpu_custom_call.1} parent=27 // pred_check_branch
          %190 = sbr.rel (%p188) target = $region36
        $region35: #{tpu_custom_call.1} parent=27 // pred_region
          %192 = dma.done %s184, 512
        $region36: #{tpu_custom_call.1} parent=27 // pred_fallthru
          _
        %s193 = sand.u32 %s30, 1
        %s194 = scalar_lea.sflag [#allocation3], %s193
        %s195 = sand.u32 %s30, 1
        %s196 = smul.addr %s195, 64
        %s197 = scalar_lea.vmem [#allocation2], %s196
        %p198 = pneg %p43
        %p199 = pneg %p40
        %s200 = sand.u32 %s56, 1
        %s201 = scalar_lea.sflag [#allocation6], %s200
        %s202 = sand.u32 %s56, 1
        %s203 = smul.addr %s202, 32
        %s204 = scalar_lea.vmem [#allocation5], %s203
        %p205 = pneg %p69
        %p206 = pneg %p66
        %p207 = pneg %p95
        %p208 = pneg %p92
        %s209 = sand.u32 %s82, 1
        %s210 = scalar_lea.sflag [#allocation4], %s209
        %s211 = sand.u32 %s82, 1
        %s212 = smul.addr %s211, 64
        %s213 = scalar_lea.vmem [#allocation7], %s212
        %s214 = smul.u32 16, %s22
        %s215 = smul.u32 16, %s22
        %s216 = ssub.s32 100, %s215
        %p217 = scmp.lt.s32.totalorder %s216, 16
        %s218 = scalar_select %p217, %s216, 16
        %s219 = smul.u32 %s218, 2
        %s220 = smul.u32 16, %s22
        %v221 = vld [vmem:[%s177] sm:$0xf]
        %v222 = vld [vmem:[%s177 + $0x4] sm:$0xf]
        %v223 = vld [vmem:[%s177 + $0x8] sm:$0xf]
        %v224 = vld [vmem:[%s177 + $0xc] sm:$0xf]
        %v225 = vld [vmem:[%s177 + $0x10] sm:$0xf]
        %v226 = vld [vmem:[%s177 + $0x14] sm:$0xf]
        %v227 = vld [vmem:[%s177 + $0x18] sm:$0xf]
        %v228 = vld [vmem:[%s177 + $0x1c] sm:$0xf]
        %v229 = vld [vmem:[%s177 + $0x20] sm:$0xf]
        %v230 = vld [vmem:[%s177 + $0x24] sm:$0xf]
        %v231 = vld [vmem:[%s177 + $0x28] sm:$0xf]
        %v232 = vld [vmem:[%s177 + $0x2c] sm:$0xf]
        %v233 = vld [vmem:[%s177 + $0x30] sm:$0xf]
        %v234 = vld [vmem:[%s177 + $0x34] sm:$0xf]
        %v235 = vld [vmem:[%s177 + $0x38] sm:$0xf]
        %v236 = vld [vmem:[%s177 + $0x3c] sm:$0xf]
        %v237 = vld [vmem:[%s187] sm:$0x3]
        %v238 = vld [vmem:[%s187 + $0x2] sm:$0x3]
        %v239 = vld [vmem:[%s187 + $0x4] sm:$0x3]
        %v240 = vld [vmem:[%s187 + $0x6] sm:$0x3]
        %v241 = vld [vmem:[%s187 + $0x8] sm:$0x3]
        %v242 = vld [vmem:[%s187 + $0xa] sm:$0x3]
        %v243 = vld [vmem:[%s187 + $0xc] sm:$0x3]
        %v244 = vld [vmem:[%s187 + $0xe] sm:$0x3]
        %v245 = vld [vmem:[%s187 + $0x10] sm:$0x3]
        %v246 = vld [vmem:[%s187 + $0x12] sm:$0x3]
        %v247 = vld [vmem:[%s187 + $0x14] sm:$0x3]
        %v248 = vld [vmem:[%s187 + $0x16] sm:$0x3]
        %v249 = vld [vmem:[%s187 + $0x18] sm:$0x3]
        %v250 = vld [vmem:[%s187 + $0x1a] sm:$0x3]
        %v251 = vld [vmem:[%s187 + $0x1c] sm:$0x3]
        %v252 = vld [vmem:[%s187 + $0x1e] sm:$0x3]
        %v269 = vperm.slane %v237, 0
        %v270 = vperm.slane %v237, 1
        %v271 = vperm.slane %v238, 0
        %v272 = vperm.slane %v238, 1
        %v273 = vperm.slane %v239, 0
        %v274 = vperm.slane %v239, 1
        %v275 = vperm.slane %v240, 0
        %v276 = vperm.slane %v240, 1
        %v277 = vperm.slane %v241, 0
        %v278 = vperm.slane %v241, 1
        %v279 = vperm.slane %v242, 0
        %v280 = vperm.slane %v242, 1
        %v281 = vperm.slane %v243, 0
        %v282 = vperm.slane %v243, 1
        %v283 = vperm.slane %v244, 0
        %v284 = vperm.slane %v244, 1
        %v285 = vperm.slane %v245, 0
        %v286 = vperm.slane %v245, 1
        %v287 = vperm.slane %v246, 0
        %v288 = vperm.slane %v246, 1
        %v289 = vperm.slane %v247, 0
        %v290 = vperm.slane %v247, 1
        %v291 = vperm.slane %v248, 0
        %v292 = vperm.slane %v248, 1
        %v293 = vperm.slane %v249, 0
        %v294 = vperm.slane %v249, 1
        %v295 = vperm.slane %v250, 0
        %v296 = vperm.slane %v250, 1
        %v297 = vperm.slane %v251, 0
        %v298 = vperm.slane %v251, 1
        %v299 = vperm.slane %v252, 0
        %v300 = vperm.slane %v252, 1
        %v301 = vrot.slane %v270, 6
        %v302 = vrot.slane %v272, 6
        %v303 = vrot.slane %v274, 6
        %v304 = vrot.slane %v276, 6
        %v305 = vrot.slane %v278, 6
        %v306 = vrot.slane %v280, 6
        %v307 = vrot.slane %v282, 6
        %v308 = vrot.slane %v284, 6
        %v309 = vrot.slane %v286, 6
        %v310 = vrot.slane %v288, 6
        %v311 = vrot.slane %v290, 6
        %v312 = vrot.slane %v292, 6
        %v313 = vrot.slane %v294, 6
        %v314 = vrot.slane %v296, 6
        %v315 = vrot.slane %v298, 6
        %v316 = vrot.slane %v300, 6
        %vm317 = vcmask 1041408
        %v318 = vsel %vm317, %v269, %v301
        %v319 = vsel %vm317, %v271, %v302
        %v320 = vsel %vm317, %v273, %v303
        %v321 = vsel %vm317, %v275, %v304
        %v322 = vsel %vm317, %v277, %v305
        %v323 = vsel %vm317, %v279, %v306
        %v324 = vsel %vm317, %v281, %v307
        %v325 = vsel %vm317, %v283, %v308
        %v326 = vsel %vm317, %v285, %v309
        %v327 = vsel %vm317, %v287, %v310
        %v328 = vsel %vm317, %v289, %v311
        %v329 = vsel %vm317, %v291, %v312
        %v330 = vsel %vm317, %v293, %v313
        %v331 = vsel %vm317, %v295, %v314
        %v332 = vsel %vm317, %v297, %v315
        %v333 = vsel %vm317, %v299, %v316
        %v350 = vadd.f32 %v221, %v318
        %v351 = vadd.f32 %v222, %v319
        %v352 = vadd.f32 %v223, %v320
        %v353 = vadd.f32 %v224, %v321
        %v354 = vadd.f32 %v225, %v322
        %v355 = vadd.f32 %v226, %v323
        %v356 = vadd.f32 %v227, %v324
        %v357 = vadd.f32 %v228, %v325
        %v358 = vadd.f32 %v229, %v326
        %v359 = vadd.f32 %v230, %v327
        %v360 = vadd.f32 %v231, %v328
        %v361 = vadd.f32 %v232, %v329
        %v362 = vadd.f32 %v233, %v330
        %v363 = vadd.f32 %v234, %v331
        %v364 = vadd.f32 %v235, %v332
        %v365 = vadd.f32 %v236, %v333
        %366 = vst [vmem:[%s213] sm:$0xf] %v350
        %367 = vst [vmem:[%s213 + $0x4] sm:$0xf] %v351
        %368 = vst [vmem:[%s213 + $0x8] sm:$0xf] %v352
        %369 = vst [vmem:[%s213 + $0xc] sm:$0xf] %v353
        %370 = vst [vmem:[%s213 + $0x10] sm:$0xf] %v354
        %371 = vst [vmem:[%s213 + $0x14] sm:$0xf] %v355
        %372 = vst [vmem:[%s213 + $0x18] sm:$0xf] %v356
        %373 = vst [vmem:[%s213 + $0x1c] sm:$0xf] %v357
        %374 = vst [vmem:[%s213 + $0x20] sm:$0xf] %v358
        %375 = vst [vmem:[%s213 + $0x24] sm:$0xf] %v359
        %376 = vst [vmem:[%s213 + $0x28] sm:$0xf] %v360
        %377 = vst [vmem:[%s213 + $0x2c] sm:$0xf] %v361
        %378 = vst [vmem:[%s213 + $0x30] sm:$0xf] %v362
        %379 = vst [vmem:[%s213 + $0x34] sm:$0xf] %v363
        %380 = vst [vmem:[%s213 + $0x38] sm:$0xf] %v364
        %381 = vst [vmem:[%s213 + $0x3c] sm:$0xf] %v365
        %s382 = sand.u32 %s82, 1
        %s383 = scalar_lea.sflag [#allocation4], %s382
        %s384 = sand.u32 %s82, 1
        %s385 = smul.addr %s384, 64
        %s386 = scalar_lea.vmem [#allocation7], %s385
        // Predicated region
        $region37: #{tpu_custom_call.1} parent=27 // pred_check
          %p387 = pneg %p92
        $region38: #{tpu_custom_call.1} parent=27 // pred_check_branch
          %389 = sbr.rel (%p387) target = $region40
        $region39: #{tpu_custom_call.1} parent=27 // pred_region
          %s390 = smul.u32 16, %s22
          %392 = vsyncadd %s383, 0
          %s393 = smul.addr %s390, 2
          %s394 = smul.addr %s393, 2
          %s395 = scalar_lea.hbm %s2, %s394
          %s396 = sshll.u32 %s386, 4
          %s397 = int_to_ptr.vmem [resolvable:$true] %s396
          %s398 = sshll.u32 %s395, 4
          %s399 = int_to_ptr.hbm [resolvable:$true] %s398
          %404 = dma.vmem_to_hbm [thread:$0]  %s397, 1024, %s399, %s383, 64, 64, 4
        $region40: #{tpu_custom_call.1} parent=27 // pred_fallthru
          _
      $region28: #{tpu_custom_call.1} parent=5 // pred_fallthru
        _
      %p405 = scmp.le.s32.totalorder 2, %s17
      // Predicated region
      $region41: #{tpu_custom_call.1} parent=5 // pred_check
        %p406 = pneg %p405
      $region42: #{tpu_custom_call.1} parent=5 // pred_check_branch
        %408 = sbr.rel (%p406) target = $region44
      $region43: #{tpu_custom_call.1} parent=5 // pred_region
        %s409 = ssub.s32 %s17, 2
        // Predicated region
        $region45: #{tpu_custom_call.1} parent=43 // pred_check
          %p410 = pneg %p98
        $region46: #{tpu_custom_call.1} parent=43 // pred_check_branch
          %412 = sbr.rel (%p410) target = $region48
        $region47: #{tpu_custom_call.1} parent=43 // pred_region
          %s413 = sand.u32 %s83, 1
          %s414 = scalar_lea.sflag [#allocation4], %s413
          %s415 = sand.u32 %s83, 1
          %s416 = smul.addr %s415, 64
          %s417 = scalar_lea.vmem [#allocation7], %s416
          %419 = dma.done %s414, 1024
        $region48: #{tpu_custom_call.1} parent=43 // pred_fallthru
          _
      $region44: #{tpu_custom_call.1} parent=5 // pred_fallthru
        _
    $region6: #{tpu_custom_call.1} parent=1 // loop_footer
      %s21 = sadd.s32 1, %s17
    $region7: #{tpu_custom_call.1} parent=1 // loop_footer_branch
      %16 = sbr.rel target = $region3
    $region8: #{tpu_custom_call.1} parent=1 // loop_exit
      _
    %420 = vsyncpa [#allocation3], 1
    %s421 = scalar_lea.sflag [#allocation3], 1
    %422 = vsyncpa %s421, 1
    %423 = vsyncpa [#allocation6], 1
    %s424 = scalar_lea.sflag [#allocation6], 1
    %425 = vsyncpa %s424, 1
    %426 = vsyncpa [#allocation4], 1
    %s427 = scalar_lea.sflag [#allocation4], 1
    %428 = vsyncpa %s427, 1

</llo_original>
